<compile_context>
chip_gen: v6e
topology: v6e:2x2x1
jax: 0.10.0
libtpu: 0.0.40
codegen_flags: <defaults>
</compile_context>

<pallas_src>
import functools

import jax
import jax.numpy as jnp
from jax import lax
from jax.experimental import pallas as pl
from jax.experimental.pallas import tpu as pltpu


def _focal_loss_kernel(logits_ref, labels_ref, out_ref, acc_ref,
                       *, gamma, tile_p, valid_pixels, needs_mask):
    j = pl.program_id(0)                       # pixel-tile index (parallel axis)
    b = pl.program_id(1)                       # batch index (accumulation axis)

    x = logits_ref[0].astype(jnp.float32)      # (N, tile_p)
    lab = labels_ref[0]                        # (1, tile_p) int32

    # Softmax pieces with a single transcendental pass:
    #   pt = exp(x[label] - m) / sum_c exp(x[c] - m)
    m = jnp.max(x, axis=0, keepdims=True)                                # (1, T)
    e = jnp.exp(x - m)                                                   # (N, T)
    denom = jnp.sum(e, axis=0, keepdims=True)                            # (1, T)
    # One-hot select of the true class (no gather).  NOTE: out-of-range labels
    # (e.g. an ignore_index) silently select 0 -> finite spurious loss; the
    # reference PyTorch module has no ignore_index either.
    cls_idx = lax.broadcasted_iota(jnp.int32, x.shape, 0)                # (N, T)
    sel = jnp.sum(jnp.where(cls_idx == lab, e, 0.0), axis=0, keepdims=True)

    pt = sel / denom                           # exact divide (keeps 1e-5 tolerance)
    q = 1.0 - pt

    # Focal modulation (1 - pt) ** gamma: integer gamma -> repeated multiply,
    # avoiding an extra exp/log pair on the single EUP.
    g = float(gamma)
    if g.is_integer() and 0.0 <= g <= 8.0:
        gi = int(g)
        mod = jnp.ones_like(q) if gi == 0 else q
        for _ in range(max(gi - 1, 0)):
            mod = mod * q
    else:
        mod = q ** g

    if needs_mask:
        # Ragged last tile: mask out-of-range lanes BEFORE the cross-lane sum.
        pix = j * tile_p + lax.broadcasted_iota(jnp.int32, mod.shape, 1)
        mod = jnp.where(pix < valid_pixels, mod, 0.0)

    tile_sum = jnp.sum(mod, axis=1, keepdims=True)                       # (1, 1)

    @pl.when(b == 0)
    def _():
        acc_ref[...] = tile_sum

    @pl.when(b != 0)
    def _():
        acc_ref[...] += tile_sum

    @pl.when(b == pl.num_programs(1) - 1)
    def _():
        out_ref[...] = acc_ref[...]            # one per-tile partial sum


def focal_loss(logits, labels, *, alpha=0.25, gamma=2.0, max_tile_p=None):
    """logits: (B, N, W, H) float (f32 or bf16); labels: (B, W, H) int.
    Returns scalar mean focal loss (reduction='mean', matching the module)."""
    # TODO(synk): per-class `weight` and reduction='none'/'sum' variants are not
    # implemented; the module defaults (weight=None, reduction='mean') are used.
    B, N, W, H = logits.shape
    WH = W * H
    total = B * WH

    # ---- VMEM-aware tile sizing (per TPU generation) ----
    try:
        vmem_cap = int(pltpu.get_tpu_info().vmem_capacity_bytes)
    except Exception:
        vmem_cap = 64 << 20                        # conservative: v7x per-core VMEM
    vmem_cap = max(vmem_cap, 32 << 20)
    tile_budget = vmem_cap // 2                    # bytes for tiles + temporaries
    vmem_limit = int(max(min((vmem_cap * 3) // 4, vmem_cap - (8 << 20)), 32 << 20))

    in_bytes = jnp.dtype(logits.dtype).itemsize
    # Per-lane footprint: double-buffered logits tile (input dtype), double-
    # buffered int32 labels tile, f32 upcast + exp(x-m) + one-hot-masked copy
    # (each N x tp f32), and ~16 (1, tp)-shaped f32 temporaries / accumulator.
    bytes_per_lane = 2 * N * in_bytes + 2 * 4 + 3 * N * 4 + 16 * 4
    tp = tile_budget // max(bytes_per_lane, 1)
    wh_up = ((WH + 127) // 128) * 128
    tp = min(tp, wh_up)                            # never wider than the image
    if max_tile_p is not None:
        tp = min(tp, int(max_tile_p))
    tp = max(128, (tp // 128) * 128)               # lane-aligned

    T = (WH + tp - 1) // tp                        # ragged last tile handled in-kernel
    needs_mask = (T * tp != WH)

    # Free reshapes only (no transpose, no pad): (B, N, WH) and (B, 1, WH).
    logits_r = logits.reshape(B, N, WH)
    labels_r = labels.astype(jnp.int32).reshape(B, 1, WH)

    kernel = functools.partial(
        _focal_loss_kernel,
        gamma=float(gamma), tile_p=tp,
        valid_pixels=WH, needs_mask=needs_mask,
    )

    partial_sums = pl.pallas_call(
        kernel,
        out_shape=jax.ShapeDtypeStruct((T, 1), jnp.float32),
        grid_spec=pltpu.PrefetchScalarGridSpec(
            num_scalar_prefetch=0,
            grid=(T, B),
            in_specs=[
                pl.BlockSpec((1, N, tp), lambda j, b: (b, 0, j)),   # logits tile
                pl.BlockSpec((1, 1, tp), lambda j, b: (b, 0, j)),   # labels tile
            ],
            out_specs=pl.BlockSpec((1, 1), lambda j, b: (j, 0)),    # per-tile partial
            scratch_shapes=[pltpu.VMEM((1, 1), jnp.float32)],       # batch accumulator
        ),
        compiler_params=pltpu.CompilerParams(
            dimension_semantics=("parallel", "arbitrary"),  # pixel tiles across TCs
            vmem_limit_bytes=vmem_limit,
        ),
    )(logits_r, labels_r)

    # alpha and the mean (1/total) fold into a single JAX-side scalar scale.
    return jnp.sum(partial_sums) * jnp.float32(alpha / total)


def _focal_loss_ref(logits, labels, alpha=0.25, gamma=2.0):
    """Pure-JAX reference mirroring the PyTorch module."""
    logp = jax.nn.log_softmax(logits.astype(jnp.float32), axis=1)     # (B,N,W,H)
    ce = -jnp.take_along_axis(logp, labels[:, None].astype(jnp.int32), axis=1)[:, 0]
    pt = jnp.exp(-ce)
    loss = alpha * (1.0 - pt) ** gamma
    return jnp.mean(loss)


if __name__ == "__main__":
    key = jax.random.PRNGKey(0)
    k1, k2, k3, k4 = jax.random.split(key, 4)

    # Base check: exact multiple of the lane width (no ragged tile).
    B, N, W, H = 2, 4, 16, 16
    logits = jax.random.normal(k1, (B, N, W, H), dtype=jnp.float32)
    labels = jax.random.randint(k2, (B, W, H), 0, N, dtype=jnp.int32)
    loss = jax.block_until_ready(focal_loss(logits, labels))
    ref = jax.block_until_ready(_focal_loss_ref(logits, labels))
    assert jnp.allclose(loss, ref, atol=1e-5, rtol=1e-5), (loss, ref)

    # Ragged / multi-tile check: exercises the unpadded partial edge block,
    # the in-kernel mask, and the cross-batch accumulation on a small tile cap.
    B2, N2, W2, H2 = 2, 5, 24, 24
    logits2 = jax.random.normal(k3, (B2, N2, W2, H2), dtype=jnp.float32)
    labels2 = jax.random.randint(k4, (B2, W2, H2), 0, N2, dtype=jnp.int32)
    loss2 = jax.block_until_ready(focal_loss(logits2, labels2, max_tile_p=256))
    ref2 = jax.block_until_ready(_focal_loss_ref(logits2, labels2))
    assert jnp.allclose(loss2, ref2, atol=1e-5, rtol=1e-5), (loss2, ref2)

    print("KERNEL_OK")
</pallas_src>

<mosaic_0001>
module attributes {stable_mosaic.version = 11 : i64} {
  func.func @_focal_loss_kernel(%arg0: i32, %arg1: i32, %arg2: memref<1x4x256xf32, #tpu.memory_space<vmem>>, %arg3: memref<1x1x256xi32, #tpu.memory_space<vmem>>, %arg4: memref<1x1xf32, #tpu.memory_space<vmem>>, %arg5: memref<1x1xf32, #tpu.memory_space<vmem>>) attributes {dimension_semantics = [#tpu.dimension_semantics<parallel>, #tpu.dimension_semantics<arbitrary>], iteration_bounds = array<i64: 1, 2>, scalar_prefetch = 0 : i64, scratch_operands = 1 : i64, tpu.core_type = #tpu.core_type<tc>, window_params = [{transform_indices = @transform_0, window_bounds = array<i64: 1, 4, 256>}, {transform_indices = @transform_1, window_bounds = array<i64: 1, 1, 256>}, {transform_indices = @transform_2, window_bounds = array<i64: 1, 1>}]} {
    %c0 = arith.constant 0 : index
    %c0_0 = arith.constant 0 : index
    %c0_1 = arith.constant 0 : index
    %0 = vector.load %arg2[%c0, %c0_0, %c0_1] : memref<1x4x256xf32, #tpu.memory_space<vmem>>, vector<1x4x256xf32>
    %1 = vector.shape_cast %0 : vector<1x4x256xf32> to vector<4x256xf32>
    %c0_2 = arith.constant 0 : index
    %c0_3 = arith.constant 0 : index
    %c0_4 = arith.constant 0 : index
    %2 = vector.load %arg3[%c0_2, %c0_3, %c0_4] : memref<1x1x256xi32, #tpu.memory_space<vmem>>, vector<1x1x256xi32>
    %3 = vector.shape_cast %2 : vector<1x1x256xi32> to vector<1x256xi32>
    %cst = arith.constant dense<0xFF800000> : vector<256xf32>
    %4 = vector.multi_reduction <maximumf>, %1, %cst [0] : vector<4x256xf32> to vector<256xf32>
    %5 = vector.shape_cast %4 : vector<256xf32> to vector<1x256xf32>
    %6 = vector.broadcast %5 : vector<1x256xf32> to vector<4x256xf32>
    %7 = arith.subf %1, %6 : vector<4x256xf32>
    %8 = math.exp %7 : vector<4x256xf32>
    %cst_5 = arith.constant dense<0.000000e+00> : vector<256xf32>
    %9 = vector.multi_reduction <add>, %8, %cst_5 [0] : vector<4x256xf32> to vector<256xf32>
    %10 = vector.shape_cast %9 : vector<256xf32> to vector<1x256xf32>
    %11 = tpu.iota {dimensions = array<i32: 0>} : vector<4x256xi32>
    %12 = vector.broadcast %3 : vector<1x256xi32> to vector<4x256xi32>
    %13 = arith.cmpi eq, %11, %12 : vector<4x256xi32>
    %cst_6 = arith.constant 0.000000e+00 : f32
    %14 = vector.broadcast %cst_6 : f32 to vector<4x256xf32>
    %15 = arith.select %13, %8, %14 : vector<4x256xi1>, vector<4x256xf32>
    %cst_7 = arith.constant dense<0.000000e+00> : vector<256xf32>
    %16 = vector.multi_reduction <add>, %15, %cst_7 [0] : vector<4x256xf32> to vector<256xf32>
    %17 = vector.shape_cast %16 : vector<256xf32> to vector<1x256xf32>
    %18 = arith.divf %17, %10 : vector<1x256xf32>
    %cst_8 = arith.constant 1.000000e+00 : f32
    %19 = vector.broadcast %cst_8 : f32 to vector<1x256xf32>
    %20 = arith.subf %19, %18 : vector<1x256xf32>
    %21 = arith.mulf %20, %20 : vector<1x256xf32>
    %cst_9 = arith.constant dense<0.000000e+00> : vector<1xf32>
    %22 = vector.multi_reduction <add>, %21, %cst_9 [1] : vector<1x256xf32> to vector<1xf32>
    %23 = vector.shape_cast %22 : vector<1xf32> to vector<1x1xf32>
    %c0_i32 = arith.constant 0 : i32
    %24 = arith.cmpi eq, %arg1, %c0_i32 : i32
    %25 = arith.extui %24 : i1 to i32
    %c0_i32_10 = arith.constant 0 : i32
    %26 = arith.cmpi ne, %25, %c0_i32_10 : i32
    scf.if %26 {
      %c0_14 = arith.constant 0 : index
      %c0_15 = arith.constant 0 : index
      %33 = vector.load %arg5[%c0_14, %c0_15] : memref<1x1xf32, #tpu.memory_space<vmem>>, vector<1x1xf32>
      tpu.vector_store %arg5[%c0_14, %c0_15], %23 {strides = array<i32>} : memref<1x1xf32, #tpu.memory_space<vmem>>, vector<1x1xf32>,
    } else {
    }
    %c0_i32_11 = arith.constant 0 : i32
    %27 = arith.cmpi ne, %arg1, %c0_i32_11 : i32
    %28 = arith.extui %27 : i1 to i32
    %c0_i32_12 = arith.constant 0 : i32
    %29 = arith.cmpi ne, %28, %c0_i32_12 : i32
    scf.if %29 {
      %c0_14 = arith.constant 0 : index
      %c0_15 = arith.constant 0 : index
      %33 = vector.load %arg5[%c0_14, %c0_15] : memref<1x1xf32, #tpu.memory_space<vmem>>, vector<1x1xf32>
      %34 = arith.addf %33, %23 : vector<1x1xf32>
      %c0_16 = arith.constant 0 : index
      %c0_17 = arith.constant 0 : index
      %35 = vector.load %arg5[%c0_16, %c0_17] : memref<1x1xf32, #tpu.memory_space<vmem>>, vector<1x1xf32>
      tpu.vector_store %arg5[%c0_16, %c0_17], %34 {strides = array<i32>} : memref<1x1xf32, #tpu.memory_space<vmem>>, vector<1x1xf32>,
    } else {
    }
    %c1_i32 = arith.constant 1 : i32
    %30 = arith.cmpi eq, %arg1, %c1_i32 : i32
    %31 = arith.extui %30 : i1 to i32
    %c0_i32_13 = arith.constant 0 : i32
    %32 = arith.cmpi ne, %31, %c0_i32_13 : i32
    scf.if %32 {
      %c0_14 = arith.constant 0 : index
      %c0_15 = arith.constant 0 : index
      %33 = vector.load %arg5[%c0_14, %c0_15] : memref<1x1xf32, #tpu.memory_space<vmem>>, vector<1x1xf32>
      %c0_16 = arith.constant 0 : index
      %c0_17 = arith.constant 0 : index
      %34 = vector.load %arg4[%c0_16, %c0_17] : memref<1x1xf32, #tpu.memory_space<vmem>>, vector<1x1xf32>
      tpu.vector_store %arg4[%c0_16, %c0_17], %33 {strides = array<i32>} : memref<1x1xf32, #tpu.memory_space<vmem>>, vector<1x1xf32>,
    } else {
    }
    return
  }
  func.func @transform_0(%arg0: i32, %arg1: i32) -> (i32, i32, i32) {
    %c0_i32 = arith.constant 0 : i32
    %c0_i32_0 = arith.constant 0 : i32
    return %arg1, %c0_i32, %arg0 : i32, i32, i32
  }
  func.func @transform_1(%arg0: i32, %arg1: i32) -> (i32, i32, i32) {
    %c0_i32 = arith.constant 0 : i32
    %c0_i32_0 = arith.constant 0 : i32
    return %arg1, %c0_i32, %arg0 : i32, i32, i32
  }
  func.func @transform_2(%arg0: i32, %arg1: i32) -> (i32, i32) {
    %c0_i32 = arith.constant 0 : i32
    %c0_i32_0 = arith.constant 0 : i32
    return %arg0, %c0_i32 : i32, i32
  }
}

</mosaic_0001>

<llo_original>
// kernel: tpu_custom_call.1
$region0: #{tpu_custom_call.1}
  #allocation0 [shape = 'u32[]', space=smem, size = 0x4, offset = 0x4, fixed_abs, tag = 'smem constant byte address 0x4 - core index']
  #allocation1 [shape = 'u32[144,128]{1,0:T(1,128)}', space=vmem, size = 0x12000, scoped, tag = 'internal scratch']
  #allocation2 [shape = 'f32[1,1]{1,0:T(1,128)}', space=vmem, size = 0x200, scoped, tag = 'scratch operand']
  %s0 = inlined_call_operand.hbm [shape: f32[2,4,256], index: 0, kind: input, shape index: {}]
  %s1 = inlined_call_operand.hbm [shape: s32[2,1,256], index: 1, kind: input, shape index: {}]
  %s2 = inlined_call_operand.hbm [shape: f32[1,1], index: 2, kind: output, shape index: {}]
  %s3 = sld [smem:[#allocation0]]
  $region61: #{tpu_custom_call.1} parent=0
    _
  %s5 = ssub.s32 1, %s3
  %s6 = scalar_select 0, %s5, %s3
  $region1: #{tpu_custom_call.1} parent=0
    #allocation3 [shape = 'u8[8192]{0}', space=vmem, size = 0x2000, scoped, tag = 'input window, operand 0']
    #allocation4 [shape = 's32[2]{0}', space=sflag, size = 0x8, scoped, tag = 'scoped memory for tpu_custom_call.1']
    #allocation5 [shape = 's32[2]{0}', space=sflag, size = 0x8, scoped, tag = 'scoped memory for tpu_custom_call.1']
    #allocation6 [shape = 'u8[2048]{0}', space=vmem, size = 0x800, scoped, tag = 'input window, operand 1']
    #allocation7 [shape = 's32[2]{0}', space=sflag, size = 0x8, scoped, tag = 'scoped memory for tpu_custom_call.1']
    #allocation8 [shape = 'u8[512]{0}', space=vmem, size = 0x400, scoped, tag = 'output window, operand 0, single buffered']
    %7 = vsyncpa [#allocation4], 0
    %s8 = scalar_lea.sflag [#allocation4], 1
    %9 = vsyncpa %s8, 0
    %10 = vsyncpa [#allocation7], 0
    %s11 = scalar_lea.sflag [#allocation7], 1
    %12 = vsyncpa %s11, 0
    %13 = vsyncpa [#allocation5], 0
    loop: start=0, step=1, limit=4
    $region2: #{tpu_custom_call.1} parent=1 // loop_pre_header
      _
    $region3: #{tpu_custom_call.1} parent=1 // loop_header
      %s15 = sphi 0, %s19
      %p16 = scmp.ge.s32.totalorder %s15, 4
      %s22 = sphi 0, %s34
      %s23 = sphi 0, %s30
      %s24 = sphi 0, %s22
      %s25 = sphi 0, %s23
      %s26 = sphi 0, %s24
      %s27 = sphi 0, %s25
      %s39 = sphi 0, %s41
      %s42 = sphi 0, %s39
      %s43 = sphi 0, %s42
      %s59 = sphi 0, %s43
      %s67 = sphi 0, %s69
      %s70 = sphi 0, %s67
      %s71 = sphi 0, %s70
      %s87 = sphi 0, %s71
      %s93 = sphi 0, %s95
      %s96 = sphi 0, %s93
      %s97 = sphi 0, %s96
      %s113 = sphi 0, %s97
    $region4: #{tpu_custom_call.1} parent=1 // loop_header_branch
      %18 = sbr.rel (%p16) target = $region8
    $region5: #{tpu_custom_call.1} parent=1 // loop_body
      %s20 = ssub.s32 %s15, 1
      %s21 = ssub.s32 %s15, 2
      %s28 = sadd.s32 1, %s23
      %p29 = scmp.ge.s32.totalorder %s28, 2
      %s30 = scalar_select %p29, 0, %s28
      %s31 = sadd.s32 1, %s22
      %s32 = scalar_select %p29, %s31, %s22
      %p33 = scmp.ge.s32.totalorder %s32, 1
      %s34 = scalar_select %p33, 0, %s32
      %s35 = ssub.s32 %s23, %s30
      %s36 = ssub.s32 %s22, %s34
      %s37 = sor.u32 %s35, %s36
      %p38 = scmp.eq.s32.totalorder %s37, 0
      %s40 = sadd.s32 %s39, 1
      %s41 = scalar_select %p38, %s39, %s40
      %p44 = pneg %p38
      %p45 = scmp.eq.s32.totalorder %s15, 1
      %p46 = por %p44, %p45
      %p47 = scmp.ne.s32.totalorder %s39, %s42
      %p48 = scmp.eq.s32.totalorder %s15, 0
      %p49 = por %p47, %p48
      %p50 = scmp.ne.s32.totalorder %s39, %s42
      %p51 = scmp.eq.s32.totalorder %s20, 1
      %p52 = por %p50, %p51
      %p53 = scmp.ne.s32.totalorder %s42, %s43
      %p54 = scmp.eq.s32.totalorder %s20, 0
      %p55 = por %p53, %p54
      %p56 = scmp.ne.s32.totalorder %s42, %s43
      %p57 = scmp.eq.s32.totalorder %s21, 1
      %p58 = por %p56, %p57
      %p60 = scmp.ne.s32.totalorder %s43, %s59
      %p61 = scmp.eq.s32.totalorder %s21, 0
      %p62 = por %p60, %p61
      %s63 = ssub.s32 %s23, %s30
      %s64 = ssub.s32 %s22, %s34
      %s65 = sor.u32 %s63, %s64
      %p66 = scmp.eq.s32.totalorder %s65, 0
      %s68 = sadd.s32 %s67, 1
      %s69 = scalar_select %p66, %s67, %s68
      %p72 = pneg %p66
      %p73 = scmp.eq.s32.totalorder %s15, 1
      %p74 = por %p72, %p73
      %p75 = scmp.ne.s32.totalorder %s67, %s70
      %p76 = scmp.eq.s32.totalorder %s15, 0
      %p77 = por %p75, %p76
      %p78 = scmp.ne.s32.totalorder %s67, %s70
      %p79 = scmp.eq.s32.totalorder %s20, 1
      %p80 = por %p78, %p79
      %p81 = scmp.ne.s32.totalorder %s70, %s71
      %p82 = scmp.eq.s32.totalorder %s20, 0
      %p83 = por %p81, %p82
      %p84 = scmp.ne.s32.totalorder %s70, %s71
      %p85 = scmp.eq.s32.totalorder %s21, 1
      %p86 = por %p84, %p85
      %p88 = scmp.ne.s32.totalorder %s71, %s87
      %p89 = scmp.eq.s32.totalorder %s21, 0
      %p90 = por %p88, %p89
      %s91 = ssub.s32 %s22, %s34
      %p92 = scmp.eq.s32.totalorder %s91, 0
      %s94 = sadd.s32 %s93, 1
      %s95 = scalar_select %p92, %s93, %s94
      %p98 = pneg %p92
      %p99 = scmp.eq.s32.totalorder %s15, 1
      %p100 = por %p98, %p99
      %p101 = scmp.ne.s32.totalorder %s93, %s96
      %p102 = scmp.eq.s32.totalorder %s15, 0
      %p103 = por %p101, %p102
      %p104 = scmp.ne.s32.totalorder %s93, %s96
      %p105 = scmp.eq.s32.totalorder %s20, 1
      %p106 = por %p104, %p105
      %p107 = scmp.ne.s32.totalorder %s96, %s97
      %p108 = scmp.eq.s32.totalorder %s20, 0
      %p109 = por %p107, %p108
      %p110 = scmp.ne.s32.totalorder %s96, %s97
      %p111 = scmp.eq.s32.totalorder %s21, 1
      %p112 = por %p110, %p111
      %p114 = scmp.ne.s32.totalorder %s97, %s113
      %p115 = scmp.eq.s32.totalorder %s21, 0
      %p116 = por %p114, %p115
      %p117 = scmp.le.s32.totalorder 1, %s15
      %p118 = scmp.lt.s32.totalorder %s15, 3
      %p119 = pnand %p117, %p118
      %p120 = pneg %p119
      // Predicated region
      $region9: #{tpu_custom_call.1} parent=5 // pred_check
        _
      $region10: #{tpu_custom_call.1} parent=5 // pred_check_branch
        %122 = sbr.rel (%p119) target = $region12
      $region11: #{tpu_custom_call.1} parent=5 // pred_region
        %s123 = ssub.s32 %s15, 1
      $region12: #{tpu_custom_call.1} parent=5 // pred_fallthru
        _
      %p124 = scmp.lt.s32.totalorder %s15, 2
      // Predicated region
      $region13: #{tpu_custom_call.1} parent=5 // pred_check
        %p125 = pneg %p124
      $region14: #{tpu_custom_call.1} parent=5 // pred_check_branch
        %127 = sbr.rel (%p125) target = $region16
      $region15: #{tpu_custom_call.1} parent=5 // pred_region
        // Predicated region
        $region17: #{tpu_custom_call.1} parent=15 // pred_check
          %p128 = pneg %p49
        $region18: #{tpu_custom_call.1} parent=15 // pred_check_branch
          %130 = sbr.rel (%p128) target = $region20
        $region19: #{tpu_custom_call.1} parent=15 // pred_region
          %s131 = sand.u32 %s39, 1
          %s132 = scalar_lea.sflag [#allocation4], %s131
          %s133 = sand.u32 %s39, 1
          %s134 = smul.addr %s133, 8
          %s135 = scalar_lea.vmem [#allocation3], %s134
          %s136 = smul.u32 2, %s22
          %s138 = ssub.s32 128, 128
          %139 = vsyncadd %s132, %s138
          %s140 = smul.addr %s23, 2
          %s141 = sadd.s32 %s136, %s140
          %s142 = smul.addr %s141, 64
          %s143 = scalar_lea.hbm %s0, %s142
          %s145 = sshll.u32 %s135, 4
          %s146 = int_to_ptr.vmem [resolvable:$true] %s145
          %148 = dma.hbm_to_vmem [thread:$0]  %s143, 128, %s146, %s132
        $region20: #{tpu_custom_call.1} parent=15 // pred_fallthru
          _
        // Predicated region
        $region21: #{tpu_custom_call.1} parent=15 // pred_check
          %p149 = pneg %p77
        $region22: #{tpu_custom_call.1} parent=15 // pred_check_branch
          %151 = sbr.rel (%p149) target = $region24
        $region23: #{tpu_custom_call.1} parent=15 // pred_region
          %s152 = sand.u32 %s67, 1
          %s153 = scalar_lea.sflag [#allocation7], %s152
          %s154 = sand.u32 %s67, 1
          %s155 = smul.addr %s154, 2
          %s156 = scalar_lea.vmem [#allocation6], %s155
          %s157 = smul.u32 2, %s22
          %s159 = ssub.s32 32, 32
          %160 = vsyncadd %s153, %s159
          %s161 = smul.addr %s23, 2
          %s162 = sadd.s32 %s157, %s161
          %s163 = smul.addr %s162, 16
          %s164 = scalar_lea.hbm %s1, %s163
          %s166 = sshll.u32 %s156, 4
          %s167 = int_to_ptr.vmem [resolvable:$true] %s166
          %169 = dma.hbm_to_vmem [thread:$0]  %s164, 32, %s167, %s153
        $region24: #{tpu_custom_call.1} parent=15 // pred_fallthru
          _
      $region16: #{tpu_custom_call.1} parent=5 // pred_fallthru
        _
      %p170 = scmp.le.s32.totalorder 1, %s15
      %p171 = scmp.lt.s32.totalorder %s15, 3
      %p172 = pnand %p170, %p171
      %p173 = pneg %p172
      // Predicated region
      $region25: #{tpu_custom_call.1} parent=5 // pred_check
        _
      $region26: #{tpu_custom_call.1} parent=5 // pred_check_branch
        %175 = sbr.rel (%p172) target = $region28
      $region27: #{tpu_custom_call.1} parent=5 // pred_region
        %s176 = ssub.s32 %s15, 1
        %s177 = sand.u32 %s42, 1
        %s178 = scalar_lea.sflag [#allocation4], %s177
        %s179 = sand.u32 %s42, 1
        %s180 = smul.addr %s179, 8
        %s181 = scalar_lea.vmem [#allocation3], %s180
        // Predicated region
        $region29: #{tpu_custom_call.1} parent=27 // pred_check
          %p182 = pneg %p55
        $region30: #{tpu_custom_call.1} parent=27 // pred_check_branch
          %184 = sbr.rel (%p182) target = $region32
        $region31: #{tpu_custom_call.1} parent=27 // pred_region
          %185 = dma.done %s178, 128
        $region32: #{tpu_custom_call.1} parent=27 // pred_fallthru
          _
        %s186 = sand.u32 %s70, 1
        %s187 = scalar_lea.sflag [#allocation7], %s186
        %s188 = sand.u32 %s70, 1
        %s189 = smul.addr %s188, 2
        %s190 = scalar_lea.vmem [#allocation6], %s189
        // Predicated region
        $region33: #{tpu_custom_call.1} parent=27 // pred_check
          %p191 = pneg %p83
        $region34: #{tpu_custom_call.1} parent=27 // pred_check_branch
          %193 = sbr.rel (%p191) target = $region36
        $region35: #{tpu_custom_call.1} parent=27 // pred_region
          %194 = dma.done %s187, 32
        $region36: #{tpu_custom_call.1} parent=27 // pred_fallthru
          _
        %s195 = sand.u32 %s42, 1
        %s196 = scalar_lea.sflag [#allocation4], %s195
        %s197 = sand.u32 %s42, 1
        %s198 = smul.addr %s197, 8
        %s199 = scalar_lea.vmem [#allocation3], %s198
        %p200 = pneg %p55
        %p201 = pneg %p52
        %s202 = sand.u32 %s70, 1
        %s203 = scalar_lea.sflag [#allocation7], %s202
        %s204 = sand.u32 %s70, 1
        %s205 = smul.addr %s204, 2
        %s206 = scalar_lea.vmem [#allocation6], %s205
        %p207 = pneg %p83
        %p208 = pneg %p80
        %p209 = pneg %p109
        %p210 = pneg %p106
        %s211 = smul.u32 2, %s24
        %s212 = smul.u32 2, %s24
        %v213 = vld [vmem:[%s181] sm:$0xff]
        %v214 = vld [vmem:[%s190] sm:$0x3]
        %v216 = vcombine.high %v213, %v213
        %vm218 = vcmask 1043456
        %v219 = vsel %vm218, %v213, -inf
        %v220 = vrot.slane %v219, 4
        %v221 = vmax.f32 %v219, %v220
        %v222 = vrot.slane %v221, 2
        %v223 = vmax.f32 %v221, %v222
        %v224 = vrot.slane %v223, 1
        %v225 = vmax.f32 %v223, %v224
        %v226 = vsel %vm218, %v216, -inf
        %v227 = vrot.slane %v226, 4
        %v228 = vmax.f32 %v226, %v227
        %v229 = vrot.slane %v228, 2
        %v230 = vmax.f32 %v228, %v229
        %v231 = vrot.slane %v230, 1
        %v232 = vmax.f32 %v230, %v231
        %v235 = vcombine.low %v225, %v232
        %v237 = vsub.f32 %v213, %v235
        %v238 = vmul.f32 %v237, 1.442695
        %v239 = vpow.pop %v238
        %v241 = vcombine.high %v239, %v239
        %v243 = vsel %vm218, %v239, 0.0
        %v244 = vrot.slane %v243, 4
        %v245 = vadd.f32 %v243, %v244
        %v246 = vrot.slane %v245, 2
        %v247 = vadd.f32 %v245, %v246
        %v248 = vrot.slane %v247, 1
        %v249 = vadd.f32 %v247, %v248
        %v250 = vsel %vm218, %v241, 0.0
        %v251 = vrot.slane %v250, 4
        %v252 = vadd.f32 %v250, %v251
        %v253 = vrot.slane %v252, 2
        %v254 = vadd.f32 %v252, %v253
        %v255 = vrot.slane %v254, 1
        %v256 = vadd.f32 %v254, %v255
        %v257 = vlaneseq
        %v258 = vshrl.u32 %v257, 7
        %v259 = vlaneseq
        %v260 = vshrl.u32 %v259, 7
        %v261 = vsub.s32 0, %v260
        %v262 = vrot.slane %v214, %v261
        %v263 = vlaneseq
        %v264 = vshrl.u32 %v263, 7
        %v265 = vsub.s32 1, %v264
        %v266 = vrot.slane %v214, %v265
        %vm267 = vcmp.eq.s32.totalorder %v258, %v262
        %vm268 = vcmp.eq.s32.totalorder %v258, %v266
        %v269 = vsel %vm267, %v239, 0.0
        %v270 = vsel %vm268, %v241, 0.0
        %v271 = vsel %vm218, %v269, 0.0
        %v272 = vrot.slane %v271, 4
        %v273 = vadd.f32 %v271, %v272
        %v274 = vrot.slane %v273, 2
        %v275 = vadd.f32 %v273, %v274
        %v276 = vrot.slane %v275, 1
        %v277 = vadd.f32 %v275, %v276
        %v278 = vsel %vm218, %v270, 0.0
        %v279 = vrot.slane %v278, 4
        %v280 = vadd.f32 %v278, %v279
        %v281 = vrot.slane %v280, 2
        %v282 = vadd.f32 %v280, %v281
        %v283 = vrot.slane %v282, 1
        %v284 = vadd.f32 %v282, %v283
        %v285 = vrcp.pop %v249
        %v286 = vmul.f32 %v277, %v285
        %v287 = vrcp.pop %v256
        %v288 = vmul.f32 %v284, %v287
        %v289 = vsub.f32 1.0, %v286
        %v290 = vsub.f32 1.0, %v288
        %v291 = vmul.f32 %v289, %v289
        %v292 = vmul.f32 %v290, %v290
        %v293 = vadd.f32 %v291, %v292
        %294 = vadd.xlane.f32.xlu0 %v293
        %v295 = vpop.xlane.xlu0 %294
        %p296 = scmp.eq.s32.totalorder %s25, 0
        // Predicated region
        $region37: #{tpu_custom_call.1} parent=27 // pred_check
          %p297 = pneg %p296
        $region38: #{tpu_custom_call.1} parent=27 // pred_check_branch
          %299 = sbr.rel (%p297) target = $region40
        $region39: #{tpu_custom_call.1} parent=27 // pred_region
          %vm300 = vcmask 0
          %301 = vst.msk [vmem:[#allocation2] sm:$0x1] %vm300, %v295
        $region40: #{tpu_custom_call.1} parent=27 // pred_fallthru
          _
        %p302 = scmp.ne.s32.totalorder %s25, 0
        // Predicated region
        $region41: #{tpu_custom_call.1} parent=27 // pred_check
          %p303 = pneg %p302
        $region42: #{tpu_custom_call.1} parent=27 // pred_check_branch
          %305 = sbr.rel (%p303) target = $region44
        $region43: #{tpu_custom_call.1} parent=27 // pred_region
          %v306 = vld [vmem:[#allocation2] sm:$0x1]
          %v307 = vadd.f32 %v306, %v295
          %vm308 = vcmask 0
          %309 = vst.msk [vmem:[#allocation2] sm:$0x1] %vm308, %v307
        $region44: #{tpu_custom_call.1} parent=27 // pred_fallthru
          _
        %p310 = scmp.eq.s32.totalorder %s25, 1
        // Predicated region
        $region45: #{tpu_custom_call.1} parent=27 // pred_check
          %p311 = pneg %p310
        $region46: #{tpu_custom_call.1} parent=27 // pred_check_branch
          %313 = sbr.rel (%p311) target = $region48
        $region47: #{tpu_custom_call.1} parent=27 // pred_region
          %v314 = vld [vmem:[#allocation2] sm:$0x1]
          %vm315 = vcmask 0
          %316 = vst.msk [vmem:[#allocation8] sm:$0x1] %vm315, %v314
        $region48: #{tpu_custom_call.1} parent=27 // pred_fallthru
          _
        // Predicated region
        $region49: #{tpu_custom_call.1} parent=27 // pred_check
          %p317 = pneg %p106
        $region50: #{tpu_custom_call.1} parent=27 // pred_check_branch
          %319 = sbr.rel (%p317) target = $region52
        $region51: #{tpu_custom_call.1} parent=27 // pred_region
          %s321 = ssub.s32 16, 16
          %322 = vsyncadd [#allocation5], %s321
          %s323 = smul.addr %s24, 16
          %s324 = scalar_lea.hbm %s2, %s323
          %s326 = sshll.u32 [#allocation8], 4
          %s327 = int_to_ptr.vmem [resolvable:$true] %s326
          %329 = dma.vmem_to_hbm [thread:$0]  %s327, 16, %s324, [#allocation5]
        $region52: #{tpu_custom_call.1} parent=27 // pred_fallthru
          _
        // Predicated region
        $region53: #{tpu_custom_call.1} parent=27 // pred_check
          %p330 = pneg %p106
        $region54: #{tpu_custom_call.1} parent=27 // pred_check_branch
          %332 = sbr.rel (%p330) target = $region56
        $region55: #{tpu_custom_call.1} parent=27 // pred_region
          %333 = dma.done [#allocation5], 16
        $region56: #{tpu_custom_call.1} parent=27 // pred_fallthru
          _
      $region28: #{tpu_custom_call.1} parent=5 // pred_fallthru
        _
      %p334 = scmp.le.s32.totalorder 2, %s15
      // Predicated region
      $region57: #{tpu_custom_call.1} parent=5 // pred_check
        %p335 = pneg %p334
      $region58: #{tpu_custom_call.1} parent=5 // pred_check_branch
        %337 = sbr.rel (%p335) target = $region60
      $region59: #{tpu_custom_call.1} parent=5 // pred_region
        %s338 = ssub.s32 %s15, 2
      $region60: #{tpu_custom_call.1} parent=5 // pred_fallthru
        _
    $region6: #{tpu_custom_call.1} parent=1 // loop_footer
      %s19 = sadd.s32 1, %s15
    $region7: #{tpu_custom_call.1} parent=1 // loop_footer_branch
      %14 = sbr.rel target = $region3
    $region8: #{tpu_custom_call.1} parent=1 // loop_exit
      _
    %339 = vsyncpa [#allocation4], 1
    %s340 = scalar_lea.sflag [#allocation4], 1
    %341 = vsyncpa %s340, 1
    %342 = vsyncpa [#allocation7], 1
    %s343 = scalar_lea.sflag [#allocation7], 1
    %344 = vsyncpa %s343, 1
    %345 = vsyncpa [#allocation5], 1
    %s346 = scalar_lea.sflag [#allocation5], 1
    %347 = vsyncpa %s346, 1

</llo_original>
